<compile_context>
chip_gen: v7x
topology: tpu7x:2x2x1
jax: 0.10.0
libtpu: 0.0.40
codegen_flags: <defaults>
</compile_context>

<pallas_src>
import functools

import jax
import jax.numpy as jnp
from jax.experimental import pallas as pl
from jax.experimental.pallas import tpu as pltpu


def _mlp_kernel(x_ref, wg_ref, wu_ref, wd_ref, o_ref, acc_ref):
    """One (token-tile, I-tile) step of the gated MLP.

    x_ref  : (tm, H)       activation tile (constant across the I axis)
    wg_ref : (H, ti)       gate_proj weight tile for this I-tile
    wu_ref : (H, ti)       up_proj weight tile for this I-tile
    wd_ref : (ti, H)       down_proj weight tile for this I-tile
    o_ref  : (tm, H)       output tile (written on the last I step)
    acc_ref: (tm, H) f32   VMEM accumulator scratch
    """
    i = pl.program_id(1)

    @pl.when(i == 0)
    def _init():
        acc_ref[...] = jnp.zeros_like(acc_ref)

    x = x_ref[...]
    gate = jnp.dot(x, wg_ref[...], preferred_element_type=jnp.float32)
    up = jnp.dot(x, wu_ref[...], preferred_element_type=jnp.float32)
    # SiLU(gate) * up in f32 (sigmoid -> EUP, mul -> VPU).
    h = (gate * jax.nn.sigmoid(gate)) * up
    acc_ref[...] += jnp.dot(h.astype(wd_ref.dtype), wd_ref[...],
                            preferred_element_type=jnp.float32)

    @pl.when(i == pl.num_programs(1) - 1)
    def _finalize():
        o_ref[...] = acc_ref[...].astype(o_ref.dtype)


def _vmem_capacity_bytes():
    """Best-effort VMEM capacity query; conservative fallback (v7x per-TC)."""
    try:
        info = pltpu.get_tpu_info()
        cap = getattr(info, "vmem_capacity_bytes", None)
        if cap:
            return int(cap)
    except Exception:
        pass
    return 64 << 20


def _pick_tile(total, desired, align):
    """Largest divisor of `total` that is <= desired and a multiple of
    `align`; falls back to `total` itself (single tile)."""
    t = min(desired, total)
    if t >= total:
        return total
    t = (t // align) * align
    while t >= align:
        if total % t == 0:
            return t
        t -= align
    return total


def _vmem_footprint(tm, ti, H, act_itemsize, w_itemsize):
    """Double-buffered tiles + resident accumulator + in-kernel f32 temps."""
    return (
        2 * tm * H * act_itemsize        # x tile (double-buffered)
        + 2 * H * ti * w_itemsize        # gate weight tile
        + 2 * H * ti * w_itemsize        # up weight tile
        + 2 * ti * H * w_itemsize        # down weight tile
        + 2 * tm * H * act_itemsize      # output tile
        + tm * H * 4                     # f32 accumulator (resident)
        + 4 * tm * ti * 4                # gate/up/h f32 temps + cast of h
    )


@functools.partial(jax.jit, static_argnames=("tm", "ti"))
def chameleon_mlp(x, wg_t, wu_t, wd_t, *, tm=None, ti=None):
    """x: [B, S, H]; w*_t are nn.Linear weights pre-transposed to [in, out].

    tm/ti = None -> auto-pick per TPU generation (VMEM capacity).
    """
    B, S, H = x.shape
    I = wg_t.shape[1]
    M = B * S
    x2 = x.reshape(M, H)

    act_itemsize = jnp.dtype(x.dtype).itemsize
    w_itemsize = jnp.dtype(wg_t.dtype).itemsize

    vmem_cap = _vmem_capacity_bytes()
    vmem_budget = vmem_cap - (8 << 20)          # leave compiler headroom

    # --- intermediate tile (reduction axis) -------------------------------
    if ti is None:
        ti = 512 if I % 512 == 0 else 256
    ti = _pick_tile(I, ti, 128)
    if ti == I:
        # Guard: full-I weight tiles must actually fit, otherwise demand
        # padding of intermediate_size rather than silently blowing VMEM.
        if 3 * 2 * H * I * w_itemsize > vmem_budget:
            raise ValueError(
                "intermediate_size has no 128-aligned divisor tile that fits "
                "VMEM; pad intermediate_size to a multiple of 128/256.")

    # --- token tile (parallel axis) ---------------------------------------
    if tm is None:
        # Big-VMEM parts (v5e/v6e, 128 MiB): tm=1024 -> compute-bound on v6e.
        # Small-VMEM parts (v7x, 64 MiB/TC): tm=512 is already past the ridge.
        tm = 1024 if vmem_cap >= (96 << 20) else 512
    tm = min(tm, M)
    if tm < M:
        tm = max(8, (tm // 8) * 8)               # (8,128) block constraint

    # Shrink tm (never ti) until the double-buffered footprint fits.
    while tm > 64 and _vmem_footprint(tm, ti, H, act_itemsize,
                                      w_itemsize) > vmem_budget:
        tm = max(64, tm // 2)

    n_m = pl.cdiv(M, tm)
    n_i = I // ti
    grid = (n_m, n_i)

    # --- cost estimate (weights re-streamed once per token tile) ----------
    cost = pl.CostEstimate(
        flops=6 * M * H * I,
        transcendentals=M * I,
        bytes_accessed=(2 * M * H * act_itemsize
                        + n_m * 3 * H * I * w_itemsize),
    )

    vmem_bytes = _vmem_footprint(tm, ti, H, act_itemsize, w_itemsize)
    vmem_limit = max(16 << 20, min(vmem_bytes + (8 << 20), vmem_budget))

    out2 = pl.pallas_call(
        _mlp_kernel,
        out_shape=jax.ShapeDtypeStruct((M, H), x.dtype),
        grid_spec=pltpu.PrefetchScalarGridSpec(
            num_scalar_prefetch=0,
            grid=grid,
            in_specs=[
                pl.BlockSpec((tm, H), lambda m, i: (m, 0)),   # x tile
                pl.BlockSpec((H, ti), lambda m, i: (0, i)),   # gate_proj tile
                pl.BlockSpec((H, ti), lambda m, i: (0, i)),   # up_proj tile
                pl.BlockSpec((ti, H), lambda m, i: (i, 0)),   # down_proj tile
            ],
            out_specs=pl.BlockSpec((tm, H), lambda m, i: (m, 0)),
            scratch_shapes=[pltpu.VMEM((tm, H), jnp.float32)],
        ),
        compiler_params=pltpu.CompilerParams(
            dimension_semantics=("parallel", "arbitrary"),
            vmem_limit_bytes=int(vmem_limit),
        ),
        cost_estimate=cost,
    )(x2, wg_t, wu_t, wd_t)

    return out2.reshape(B, S, H)


def _reference(x, wg_t, wu_t, wd_t):
    gate = jnp.einsum("bsh,hi->bsi", x, wg_t)
    up = jnp.einsum("bsh,hi->bsi", x, wu_t)
    h = jax.nn.silu(gate) * up
    return jnp.einsum("bsi,ih->bsh", h, wd_t)


if __name__ == "__main__":
    # Small but lane-dense config (H, I multiples of 128 so output stores are
    # unmasked full-lane vst).
    batch, seq = 2, 8
    hidden_size = 128
    intermediate_size = 256

    key = jax.random.PRNGKey(0)
    kx, kg, ku, kd = jax.random.split(key, 4)

    x = jax.random.normal(kx, (batch, seq, hidden_size), dtype=jnp.float32)

    # Deterministic "Linear" weights, PyTorch convention [out, in]; no bias
    # (config.mlp_bias = False).
    scale_h = 1.0 / jnp.sqrt(hidden_size)
    scale_i = 1.0 / jnp.sqrt(intermediate_size)
    w_gate = jax.random.uniform(kg, (intermediate_size, hidden_size),
                                minval=-scale_h, maxval=scale_h,
                                dtype=jnp.float32)
    w_up = jax.random.uniform(ku, (intermediate_size, hidden_size),
                              minval=-scale_h, maxval=scale_h,
                              dtype=jnp.float32)
    w_down = jax.random.uniform(kd, (hidden_size, intermediate_size),
                                minval=-scale_i, maxval=scale_i,
                                dtype=jnp.float32)

    # Transpose once at "weight load" time to [in, out] for row-major matmuls
    # (done outside the jitted forward -> no per-call weight re-layout).
    wg_t = w_gate.T
    wu_t = w_up.T
    wd_t = w_down.T

    # ti=128 forces n_i=2 so the streamed-weight reduction path is exercised.
    out = chameleon_mlp(x, wg_t, wu_t, wd_t, tm=256, ti=128)
    out = jax.block_until_ready(out)

    ref = _reference(x, wg_t, wu_t, wd_t)
    assert out.shape == (batch, seq, hidden_size)
    assert jnp.allclose(out, ref, atol=1e-3, rtol=1e-3), "mismatch vs reference"

    # Second shape: M not a multiple of the token tile -> partial last block.
    # TODO(synk): padded rows of a partial x tile flow through sigmoid with
    # arbitrary data; they are discarded on writeback (correct today).
    x2 = jax.random.normal(kx, (2, 12, hidden_size), dtype=jnp.float32)
    out2 = jax.block_until_ready(
        chameleon_mlp(x2, wg_t, wu_t, wd_t, tm=16, ti=128))
    ref2 = _reference(x2, wg_t, wu_t, wd_t)
    assert jnp.allclose(out2, ref2, atol=1e-3, rtol=1e-3), \
        "mismatch (partial M block)"

    # Third run: auto-picked tiles (per-generation defaults, clamped to M).
    out3 = jax.block_until_ready(chameleon_mlp(x, wg_t, wu_t, wd_t))
    assert jnp.allclose(out3, ref, atol=1e-3, rtol=1e-3), \
        "mismatch (auto tiles)"

    print("KERNEL_OK")
</pallas_src>

<mosaic_0001>
module attributes {stable_mosaic.version = 11 : i64} {
  func.func @_mlp_kernel(%arg0: i32, %arg1: i32, %arg2: memref<16x128xf32, #tpu.memory_space<vmem>>, %arg3: memref<128x128xf32, #tpu.memory_space<vmem>>, %arg4: memref<128x128xf32, #tpu.memory_space<vmem>>, %arg5: memref<128x128xf32, #tpu.memory_space<vmem>>, %arg6: memref<16x128xf32, #tpu.memory_space<vmem>>, %arg7: memref<16x128xf32, #tpu.memory_space<vmem>>) attributes {dimension_semantics = [#tpu.dimension_semantics<parallel>, #tpu.dimension_semantics<arbitrary>], iteration_bounds = array<i64: 1, 2>, scalar_prefetch = 0 : i64, scratch_operands = 1 : i64, tpu.core_type = #tpu.core_type<tc>, window_params = [{transform_indices = @transform_0, window_bounds = array<i64: 16, 128>}, {transform_indices = @transform_1, window_bounds = array<i64: 128, 128>}, {transform_indices = @transform_2, window_bounds = array<i64: 128, 128>}, {transform_indices = @transform_3, window_bounds = array<i64: 128, 128>}, {transform_indices = @transform_4, window_bounds = array<i64: 16, 128>}]} {
    %c0_i32 = arith.constant 0 : i32
    %0 = arith.cmpi eq, %arg1, %c0_i32 : i32
    %1 = arith.extui %0 : i1 to i32
    %c0_i32_0 = arith.constant 0 : i32
    %2 = arith.cmpi ne, %1, %c0_i32_0 : i32
    scf.if %2 {
      %cst_16 = arith.constant 0.000000e+00 : f32
      %23 = vector.broadcast %cst_16 : f32 to vector<16x128xf32>
      %c0_17 = arith.constant 0 : index
      %c0_18 = arith.constant 0 : index
      %24 = vector.load %arg7[%c0_17, %c0_18] : memref<16x128xf32, #tpu.memory_space<vmem>>, vector<16x128xf32>
      tpu.vector_store %arg7[%c0_17, %c0_18], %23 {strides = array<i32>} : memref<16x128xf32, #tpu.memory_space<vmem>>, vector<16x128xf32>,
    } else {
    }
    %c0 = arith.constant 0 : index
    %c0_1 = arith.constant 0 : index
    %3 = vector.load %arg2[%c0, %c0_1] : memref<16x128xf32, #tpu.memory_space<vmem>>, vector<16x128xf32>
    %c0_2 = arith.constant 0 : index
    %c0_3 = arith.constant 0 : index
    %4 = vector.load %arg3[%c0_2, %c0_3] : memref<128x128xf32, #tpu.memory_space<vmem>>, vector<128x128xf32>
    %cst = arith.constant dense<0.000000e+00> : vector<16x128xf32>
    %5 = tpu.matmul %3, %4, %cst {dimension_numbers = #tpu.dot_dimension_numbers<[1], [0], [0], [1], [0, 0, 1, 1], [], []>} : vector<16x128xf32>, vector<128x128xf32>, vector<16x128xf32> -> vector<16x128xf32>
    %c0_4 = arith.constant 0 : index
    %c0_5 = arith.constant 0 : index
    %6 = vector.load %arg4[%c0_4, %c0_5] : memref<128x128xf32, #tpu.memory_space<vmem>>, vector<128x128xf32>
    %cst_6 = arith.constant dense<0.000000e+00> : vector<16x128xf32>
    %7 = tpu.matmul %3, %6, %cst_6 {dimension_numbers = #tpu.dot_dimension_numbers<[1], [0], [0], [1], [0, 0, 1, 1], [], []>} : vector<16x128xf32>, vector<128x128xf32>, vector<16x128xf32> -> vector<16x128xf32>
    %8 = arith.negf %5 : vector<16x128xf32>
    %9 = math.exp %8 : vector<16x128xf32>
    %cst_7 = arith.constant 1.000000e+00 : f32
    %10 = vector.broadcast %cst_7 : f32 to vector<16x128xf32>
    %11 = arith.addf %10, %9 : vector<16x128xf32>
    %12 = arith.divf %10, %11 : vector<16x128xf32>
    %13 = arith.mulf %5, %12 : vector<16x128xf32>
    %14 = arith.mulf %13, %7 : vector<16x128xf32>
    %c0_8 = arith.constant 0 : index
    %c0_9 = arith.constant 0 : index
    %15 = vector.load %arg7[%c0_8, %c0_9] : memref<16x128xf32, #tpu.memory_space<vmem>>, vector<16x128xf32>
    %c0_10 = arith.constant 0 : index
    %c0_11 = arith.constant 0 : index
    %16 = vector.load %arg5[%c0_10, %c0_11] : memref<128x128xf32, #tpu.memory_space<vmem>>, vector<128x128xf32>
    %cst_12 = arith.constant dense<0.000000e+00> : vector<16x128xf32>
    %17 = tpu.matmul %14, %16, %cst_12 {dimension_numbers = #tpu.dot_dimension_numbers<[1], [0], [0], [1], [0, 0, 1, 1], [], []>} : vector<16x128xf32>, vector<128x128xf32>, vector<16x128xf32> -> vector<16x128xf32>
    %18 = arith.addf %15, %17 : vector<16x128xf32>
    %c0_13 = arith.constant 0 : index
    %c0_14 = arith.constant 0 : index
    %19 = vector.load %arg7[%c0_13, %c0_14] : memref<16x128xf32, #tpu.memory_space<vmem>>, vector<16x128xf32>
    tpu.vector_store %arg7[%c0_13, %c0_14], %18 {strides = array<i32>} : memref<16x128xf32, #tpu.memory_space<vmem>>, vector<16x128xf32>,
    %c1_i32 = arith.constant 1 : i32
    %20 = arith.cmpi eq, %arg1, %c1_i32 : i32
    %21 = arith.extui %20 : i1 to i32
    %c0_i32_15 = arith.constant 0 : i32
    %22 = arith.cmpi ne, %21, %c0_i32_15 : i32
    scf.if %22 {
      %c0_16 = arith.constant 0 : index
      %c0_17 = arith.constant 0 : index
      %23 = vector.load %arg7[%c0_16, %c0_17] : memref<16x128xf32, #tpu.memory_space<vmem>>, vector<16x128xf32>
      %c0_18 = arith.constant 0 : index
      %c0_19 = arith.constant 0 : index
      %24 = vector.load %arg6[%c0_18, %c0_19] : memref<16x128xf32, #tpu.memory_space<vmem>>, vector<16x128xf32>
      tpu.vector_store %arg6[%c0_18, %c0_19], %23 {strides = array<i32>} : memref<16x128xf32, #tpu.memory_space<vmem>>, vector<16x128xf32>,
    } else {
    }
    return
  }
  func.func @transform_0(%arg0: i32, %arg1: i32) -> (i32, i32) {
    %c0_i32 = arith.constant 0 : i32
    %c0_i32_0 = arith.constant 0 : i32
    return %arg0, %c0_i32 : i32, i32
  }
  func.func @transform_1(%arg0: i32, %arg1: i32) -> (i32, i32) {
    %c0_i32 = arith.constant 0 : i32
    %c0_i32_0 = arith.constant 0 : i32
    return %c0_i32, %arg1 : i32, i32
  }
  func.func @transform_2(%arg0: i32, %arg1: i32) -> (i32, i32) {
    %c0_i32 = arith.constant 0 : i32
    %c0_i32_0 = arith.constant 0 : i32
    return %c0_i32, %arg1 : i32, i32
  }
  func.func @transform_3(%arg0: i32, %arg1: i32) -> (i32, i32) {
    %c0_i32 = arith.constant 0 : i32
    %c0_i32_0 = arith.constant 0 : i32
    return %arg1, %c0_i32 : i32, i32
  }
  func.func @transform_4(%arg0: i32, %arg1: i32) -> (i32, i32) {
    %c0_i32 = arith.constant 0 : i32
    %c0_i32_0 = arith.constant 0 : i32
    return %arg0, %c0_i32 : i32, i32
  }
}

</mosaic_0001>

<llo_original>
// kernel: chameleon_mlp.1
$region0: #{chameleon_mlp.1}
  #allocation0 [shape = 'u32[]', space=smem, size = 0x4, offset = 0x4, fixed_abs, tag = 'smem constant byte address 0x4 - core index']
  #allocation1 [shape = 'u32[144,128]{1,0:T(1,128)}', space=vmem, size = 0x12000, scoped, tag = 'internal scratch']
  #allocation2 [shape = 'f32[16,128]{1,0:T(8,128)}', space=vmem, size = 0x2000, scoped, tag = 'scratch operand']
  %s0 = inlined_call_operand.hbm [shape: f32[16,128], index: 0, kind: input, shape index: {}]
  %s1 = inlined_call_operand.hbm [shape: f32[128,256], index: 1, kind: input, shape index: {}]
  %s2 = inlined_call_operand.hbm [shape: f32[128,256], index: 2, kind: input, shape index: {}]
  %s3 = inlined_call_operand.hbm [shape: f32[256,128], index: 3, kind: input, shape index: {}]
  %s4 = inlined_call_operand.hbm [shape: f32[16,128], index: 4, kind: output, shape index: {}]
  %s5 = sld [smem:[#allocation0]]
  $region73: #{chameleon_mlp.1} parent=0
    _
  %s7 = ssub.s32 1, %s5
  %s8 = scalar_select 0, %s7, %s5
  $region1: #{chameleon_mlp.1} parent=0
    #allocation3 [shape = 'u8[8192]{0}', space=vmem, size = 0x2000, scoped, tag = 'input window, operand 0, single buffered']
    #allocation4 [shape = 's32[2]{0}', space=sflag, size = 0x8, scoped, tag = 'scoped memory for chameleon_mlp.1']
    #allocation5 [shape = 's32[2]{0}', space=sflag, size = 0x8, scoped, tag = 'scoped memory for chameleon_mlp.1']
    #allocation6 [shape = 'u8[131072]{0}', space=vmem, size = 0x20000, scoped, tag = 'input window, operand 1']
    #allocation7 [shape = 's32[2]{0}', space=sflag, size = 0x8, scoped, tag = 'scoped memory for chameleon_mlp.1']
    #allocation8 [shape = 'u8[131072]{0}', space=vmem, size = 0x20000, scoped, tag = 'input window, operand 2']
    #allocation9 [shape = 'u8[131072]{0}', space=vmem, size = 0x20000, scoped, tag = 'input window, operand 3']
    #allocation10 [shape = 's32[2]{0}', space=sflag, size = 0x8, scoped, tag = 'scoped memory for chameleon_mlp.1']
    #allocation11 [shape = 'u8[8192]{0}', space=vmem, size = 0x2000, scoped, tag = 'output window, operand 0, single buffered']
    %9 = vsyncpa [#allocation4], 0
    %10 = vsyncpa [#allocation7], 0
    %s11 = scalar_lea.sflag [#allocation7], 1
    %12 = vsyncpa %s11, 0
    %13 = vsyncpa [#allocation10], 0
    %s14 = scalar_lea.sflag [#allocation10], 1
    %15 = vsyncpa %s14, 0
    %16 = vsyncpa [#allocation5], 0
    loop: start=0, step=1, limit=4
    $region2: #{chameleon_mlp.1} parent=1 // loop_pre_header
      _
    $region3: #{chameleon_mlp.1} parent=1 // loop_header
      %s18 = sphi 0, %s22
      %p19 = scmp.ge.s32.totalorder %s18, 4
      %s25 = sphi 0, %s37
      %s26 = sphi 0, %s33
      %s27 = sphi 0, %s25
      %s28 = sphi 0, %s26
      %s29 = sphi 0, %s27
      %s30 = sphi 0, %s28
      %s40 = sphi 0, %s42
      %s43 = sphi 0, %s40
      %s44 = sphi 0, %s43
      %s60 = sphi 0, %s44
      %s66 = sphi 0, %s68
      %s69 = sphi 0, %s66
      %s70 = sphi 0, %s69
      %s86 = sphi 0, %s70
      %s92 = sphi 0, %s94
      %s95 = sphi 0, %s92
      %s96 = sphi 0, %s95
      %s112 = sphi 0, %s96
      %s118 = sphi 0, %s120
      %s121 = sphi 0, %s118
      %s122 = sphi 0, %s121
      %s138 = sphi 0, %s122
      %s144 = sphi 0, %s146
      %s147 = sphi 0, %s144
      %s148 = sphi 0, %s147
      %s164 = sphi 0, %s148
    $region4: #{chameleon_mlp.1} parent=1 // loop_header_branch
      %21 = sbr.rel (%p19) target = $region8
    $region5: #{chameleon_mlp.1} parent=1 // loop_body
      %s23 = ssub.s32 %s18, 1
      %s24 = ssub.s32 %s18, 2
      %s31 = sadd.s32 1, %s26
      %p32 = scmp.ge.s32.totalorder %s31, 2
      %s33 = scalar_select %p32, 0, %s31
      %s34 = sadd.s32 1, %s25
      %s35 = scalar_select %p32, %s34, %s25
      %p36 = scmp.ge.s32.totalorder %s35, 1
      %s37 = scalar_select %p36, 0, %s35
      %s38 = ssub.s32 %s25, %s37
      %p39 = scmp.eq.s32.totalorder %s38, 0
      %s41 = sadd.s32 %s40, 1
      %s42 = scalar_select %p39, %s40, %s41
      %p45 = pneg %p39
      %p46 = scmp.eq.s32.totalorder %s18, 1
      %p47 = por %p45, %p46
      %p48 = scmp.ne.s32.totalorder %s40, %s43
      %p49 = scmp.eq.s32.totalorder %s18, 0
      %p50 = por %p48, %p49
      %p51 = scmp.ne.s32.totalorder %s40, %s43
      %p52 = scmp.eq.s32.totalorder %s23, 1
      %p53 = por %p51, %p52
      %p54 = scmp.ne.s32.totalorder %s43, %s44
      %p55 = scmp.eq.s32.totalorder %s23, 0
      %p56 = por %p54, %p55
      %p57 = scmp.ne.s32.totalorder %s43, %s44
      %p58 = scmp.eq.s32.totalorder %s24, 1
      %p59 = por %p57, %p58
      %p61 = scmp.ne.s32.totalorder %s44, %s60
      %p62 = scmp.eq.s32.totalorder %s24, 0
      %p63 = por %p61, %p62
      %s64 = ssub.s32 %s26, %s33
      %p65 = scmp.eq.s32.totalorder %s64, 0
      %s67 = sadd.s32 %s66, 1
      %s68 = scalar_select %p65, %s66, %s67
      %p71 = pneg %p65
      %p72 = scmp.eq.s32.totalorder %s18, 1
      %p73 = por %p71, %p72
      %p74 = scmp.ne.s32.totalorder %s66, %s69
      %p75 = scmp.eq.s32.totalorder %s18, 0
      %p76 = por %p74, %p75
      %p77 = scmp.ne.s32.totalorder %s66, %s69
      %p78 = scmp.eq.s32.totalorder %s23, 1
      %p79 = por %p77, %p78
      %p80 = scmp.ne.s32.totalorder %s69, %s70
      %p81 = scmp.eq.s32.totalorder %s23, 0
      %p82 = por %p80, %p81
      %p83 = scmp.ne.s32.totalorder %s69, %s70
      %p84 = scmp.eq.s32.totalorder %s24, 1
      %p85 = por %p83, %p84
      %p87 = scmp.ne.s32.totalorder %s70, %s86
      %p88 = scmp.eq.s32.totalorder %s24, 0
      %p89 = por %p87, %p88
      %s90 = ssub.s32 %s26, %s33
      %p91 = scmp.eq.s32.totalorder %s90, 0
      %s93 = sadd.s32 %s92, 1
      %s94 = scalar_select %p91, %s92, %s93
      %p97 = pneg %p91
      %p98 = scmp.eq.s32.totalorder %s18, 1
      %p99 = por %p97, %p98
      %p100 = scmp.ne.s32.totalorder %s92, %s95
      %p101 = scmp.eq.s32.totalorder %s18, 0
      %p102 = por %p100, %p101
      %p103 = scmp.ne.s32.totalorder %s92, %s95
      %p104 = scmp.eq.s32.totalorder %s23, 1
      %p105 = por %p103, %p104
      %p106 = scmp.ne.s32.totalorder %s95, %s96
      %p107 = scmp.eq.s32.totalorder %s23, 0
      %p108 = por %p106, %p107
      %p109 = scmp.ne.s32.totalorder %s95, %s96
      %p110 = scmp.eq.s32.totalorder %s24, 1
      %p111 = por %p109, %p110
      %p113 = scmp.ne.s32.totalorder %s96, %s112
      %p114 = scmp.eq.s32.totalorder %s24, 0
      %p115 = por %p113, %p114
      %s116 = ssub.s32 %s26, %s33
      %p117 = scmp.eq.s32.totalorder %s116, 0
      %s119 = sadd.s32 %s118, 1
      %s120 = scalar_select %p117, %s118, %s119
      %p123 = pneg %p117
      %p124 = scmp.eq.s32.totalorder %s18, 1
      %p125 = por %p123, %p124
      %p126 = scmp.ne.s32.totalorder %s118, %s121
      %p127 = scmp.eq.s32.totalorder %s18, 0
      %p128 = por %p126, %p127
      %p129 = scmp.ne.s32.totalorder %s118, %s121
      %p130 = scmp.eq.s32.totalorder %s23, 1
      %p131 = por %p129, %p130
      %p132 = scmp.ne.s32.totalorder %s121, %s122
      %p133 = scmp.eq.s32.totalorder %s23, 0
      %p134 = por %p132, %p133
      %p135 = scmp.ne.s32.totalorder %s121, %s122
      %p136 = scmp.eq.s32.totalorder %s24, 1
      %p137 = por %p135, %p136
      %p139 = scmp.ne.s32.totalorder %s122, %s138
      %p140 = scmp.eq.s32.totalorder %s24, 0
      %p141 = por %p139, %p140
      %s142 = ssub.s32 %s25, %s37
      %p143 = scmp.eq.s32.totalorder %s142, 0
      %s145 = sadd.s32 %s144, 1
      %s146 = scalar_select %p143, %s144, %s145
      %p149 = pneg %p143
      %p150 = scmp.eq.s32.totalorder %s18, 1
      %p151 = por %p149, %p150
      %p152 = scmp.ne.s32.totalorder %s144, %s147
      %p153 = scmp.eq.s32.totalorder %s18, 0
      %p154 = por %p152, %p153
      %p155 = scmp.ne.s32.totalorder %s144, %s147
      %p156 = scmp.eq.s32.totalorder %s23, 1
      %p157 = por %p155, %p156
      %p158 = scmp.ne.s32.totalorder %s147, %s148
      %p159 = scmp.eq.s32.totalorder %s23, 0
      %p160 = por %p158, %p159
      %p161 = scmp.ne.s32.totalorder %s147, %s148
      %p162 = scmp.eq.s32.totalorder %s24, 1
      %p163 = por %p161, %p162
      %p165 = scmp.ne.s32.totalorder %s148, %s164
      %p166 = scmp.eq.s32.totalorder %s24, 0
      %p167 = por %p165, %p166
      %p168 = scmp.le.s32.totalorder 1, %s18
      %p169 = scmp.lt.s32.totalorder %s18, 3
      %p170 = pnand %p168, %p169
      %p171 = pneg %p170
      // Predicated region
      $region9: #{chameleon_mlp.1} parent=5 // pred_check
        _
      $region10: #{chameleon_mlp.1} parent=5 // pred_check_branch
        %173 = sbr.rel (%p170) target = $region12
      $region11: #{chameleon_mlp.1} parent=5 // pred_region
        %s174 = ssub.s32 %s18, 1
        // Predicated region
        $region13: #{chameleon_mlp.1} parent=11 // pred_check
          %p175 = pneg %p56
        $region14: #{chameleon_mlp.1} parent=11 // pred_check_branch
          %177 = sbr.rel (%p175) target = $region16
        $region15: #{chameleon_mlp.1} parent=11 // pred_region
          %s178 = smul.u32 2, %s27
          %s180 = ssub.s32 256, 256
          %181 = vsyncadd [#allocation4], %s180
          %s182 = smul.addr %s178, 128
          %s183 = scalar_lea.hbm %s0, %s182
          %s184 = sshll.u32 [#allocation3], 4
          %s185 = int_to_ptr.vmem [resolvable:$true] %s184
          %190 = dma.hbm_to_vmem [thread:$0]  %s183, 256, %s185, [#allocation4], 128, 128, 8
        $region16: #{chameleon_mlp.1} parent=11 // pred_fallthru
          _
      $region12: #{chameleon_mlp.1} parent=5 // pred_fallthru
        _
      %p191 = scmp.lt.s32.totalorder %s18, 2
      // Predicated region
      $region17: #{chameleon_mlp.1} parent=5 // pred_check
        %p192 = pneg %p191
      $region18: #{chameleon_mlp.1} parent=5 // pred_check_branch
        %194 = sbr.rel (%p192) target = $region20
      $region19: #{chameleon_mlp.1} parent=5 // pred_region
        // Predicated region
        $region21: #{chameleon_mlp.1} parent=19 // pred_check
          %p195 = pneg %p76
        $region22: #{chameleon_mlp.1} parent=19 // pred_check_branch
          %197 = sbr.rel (%p195) target = $region24
        $region23: #{chameleon_mlp.1} parent=19 // pred_region
          %s198 = sand.u32 %s18, 1
          %s199 = scalar_lea.sflag [#allocation7], %s198
          %s200 = sand.u32 %s66, 1
          %s201 = smul.addr %s200, 128
          %s202 = scalar_lea.vmem [#allocation6], %s201
          %s204 = ssub.s32 2048, 2048
          %205 = vsyncadd %s199, %s204
          %s206 = smul.addr %s26, 128
          %s207 = scalar_lea.hbm %s1, %s206
          %s208 = sshll.u32 %s202, 4
          %s209 = int_to_ptr.vmem [resolvable:$true] %s208
          %214 = dma.hbm_to_vmem [thread:$0]  %s207, 2048, %s209, %s199, 256, 128, 8
        $region24: #{chameleon_mlp.1} parent=19 // pred_fallthru
          _
        // Predicated region
        $region25: #{chameleon_mlp.1} parent=19 // pred_check
          %p215 = pneg %p102
        $region26: #{chameleon_mlp.1} parent=19 // pred_check_branch
          %217 = sbr.rel (%p215) target = $region28
        $region27: #{chameleon_mlp.1} parent=19 // pred_region
          %s218 = sand.u32 %s18, 1
          %s219 = scalar_lea.sflag [#allocation7], %s218
          %s220 = sand.u32 %s92, 1
          %s221 = smul.addr %s220, 128
          %s222 = scalar_lea.vmem [#allocation8], %s221
          %s224 = ssub.s32 2048, 2048
          %225 = vsyncadd %s219, %s224
          %s226 = smul.addr %s26, 128
          %s227 = scalar_lea.hbm %s2, %s226
          %s228 = sshll.u32 %s222, 4
          %s229 = int_to_ptr.vmem [resolvable:$true] %s228
          %234 = dma.hbm_to_vmem [thread:$0]  %s227, 2048, %s229, %s219, 256, 128, 8
        $region28: #{chameleon_mlp.1} parent=19 // pred_fallthru
          _
        // Predicated region
        $region29: #{chameleon_mlp.1} parent=19 // pred_check
          %p235 = pneg %p128
        $region30: #{chameleon_mlp.1} parent=19 // pred_check_branch
          %237 = sbr.rel (%p235) target = $region32
        $region31: #{chameleon_mlp.1} parent=19 // pred_region
          %s238 = sand.u32 %s118, 1
          %s239 = scalar_lea.sflag [#allocation10], %s238
          %s240 = sand.u32 %s118, 1
          %s241 = smul.addr %s240, 128
          %s242 = scalar_lea.vmem [#allocation9], %s241
          %s243 = smul.u32 16, %s26
          %s245 = ssub.s32 2048, 2048
          %246 = vsyncadd %s239, %s245
          %s247 = smul.addr %s243, 128
          %s248 = scalar_lea.hbm %s3, %s247
          %s249 = sshll.u32 %s242, 4
          %s250 = int_to_ptr.vmem [resolvable:$true] %s249
          %255 = dma.hbm_to_vmem [thread:$0]  %s248, 2048, %s250, %s239, 128, 128, 8
        $region32: #{chameleon_mlp.1} parent=19 // pred_fallthru
          _
      $region20: #{chameleon_mlp.1} parent=5 // pred_fallthru
        _
      %p256 = scmp.le.s32.totalorder 1, %s18
      %p257 = scmp.lt.s32.totalorder %s18, 3
      %p258 = pnand %p256, %p257
      %p259 = pneg %p258
      // Predicated region
      $region33: #{chameleon_mlp.1} parent=5 // pred_check
        _
      $region34: #{chameleon_mlp.1} parent=5 // pred_check_branch
        %261 = sbr.rel (%p258) target = $region36
      $region35: #{chameleon_mlp.1} parent=5 // pred_region
        %s262 = ssub.s32 %s18, 1
        // Predicated region
        $region37: #{chameleon_mlp.1} parent=35 // pred_check
          %p263 = pneg %p56
        $region38: #{chameleon_mlp.1} parent=35 // pred_check_branch
          %265 = sbr.rel (%p263) target = $region40
        $region39: #{chameleon_mlp.1} parent=35 // pred_region
          %266 = dma.done [#allocation4], 256
        $region40: #{chameleon_mlp.1} parent=35 // pred_fallthru
          _
        %s267 = sand.u32 %s23, 1
        %s268 = scalar_lea.sflag [#allocation7], %s267
        %s269 = sand.u32 %s69, 1
        %s270 = smul.addr %s269, 128
        %s271 = scalar_lea.vmem [#allocation6], %s270
        // Predicated region
        $region41: #{chameleon_mlp.1} parent=35 // pred_check
          %p272 = pneg %p82
        $region42: #{chameleon_mlp.1} parent=35 // pred_check_branch
          %274 = sbr.rel (%p272) target = $region44
        $region43: #{chameleon_mlp.1} parent=35 // pred_region
          %275 = dma.done %s268, 2048
        $region44: #{chameleon_mlp.1} parent=35 // pred_fallthru
          _
        %s276 = sand.u32 %s23, 1
        %s277 = scalar_lea.sflag [#allocation7], %s276
        %s278 = sand.u32 %s95, 1
        %s279 = smul.addr %s278, 128
        %s280 = scalar_lea.vmem [#allocation8], %s279
        // Predicated region
        $region45: #{chameleon_mlp.1} parent=35 // pred_check
          %p281 = pneg %p108
        $region46: #{chameleon_mlp.1} parent=35 // pred_check_branch
          %283 = sbr.rel (%p281) target = $region48
        $region47: #{chameleon_mlp.1} parent=35 // pred_region
          %284 = dma.done %s277, 2048
        $region48: #{chameleon_mlp.1} parent=35 // pred_fallthru
          _
        %s285 = sand.u32 %s121, 1
        %s286 = scalar_lea.sflag [#allocation10], %s285
        %s287 = sand.u32 %s121, 1
        %s288 = smul.addr %s287, 128
        %s289 = scalar_lea.vmem [#allocation9], %s288
        // Predicated region
        $region49: #{chameleon_mlp.1} parent=35 // pred_check
          %p290 = pneg %p134
        $region50: #{chameleon_mlp.1} parent=35 // pred_check_branch
          %292 = sbr.rel (%p290) target = $region52
        $region51: #{chameleon_mlp.1} parent=35 // pred_region
          %293 = dma.done %s286, 2048
        $region52: #{chameleon_mlp.1} parent=35 // pred_fallthru
          _
        %p294 = pneg %p56
        %p295 = pneg %p53
        %s296 = sand.u32 %s23, 1
        %s297 = scalar_lea.sflag [#allocation7], %s296
        %s298 = sand.u32 %s69, 1
        %s299 = smul.addr %s298, 128
        %s300 = scalar_lea.vmem [#allocation6], %s299
        %p301 = pneg %p82
        %p302 = pneg %p79
        %s303 = sand.u32 %s23, 1
        %s304 = scalar_lea.sflag [#allocation7], %s303
        %s305 = sand.u32 %s95, 1
        %s306 = smul.addr %s305, 128
        %s307 = scalar_lea.vmem [#allocation8], %s306
        %p308 = pneg %p108
        %p309 = pneg %p105
        %s310 = sand.u32 %s121, 1
        %s311 = scalar_lea.sflag [#allocation10], %s310
        %s312 = sand.u32 %s121, 1
        %s313 = smul.addr %s312, 128
        %s314 = scalar_lea.vmem [#allocation9], %s313
        %p315 = pneg %p134
        %p316 = pneg %p131
        %p317 = pneg %p160
        %p318 = pneg %p157
        %s319 = smul.u32 2, %s27
        %s320 = smul.u32 16, %s28
        %s321 = smul.u32 2, %s27
        %p322 = scmp.eq.s32.totalorder %s28, 0
        // Predicated region
        $region53: #{chameleon_mlp.1} parent=35 // pred_check
          %p323 = pneg %p322
        $region54: #{chameleon_mlp.1} parent=35 // pred_check_branch
          %325 = sbr.rel (%p323) target = $region56
        $region55: #{chameleon_mlp.1} parent=35 // pred_region
          %326 = vst [vmem:[#allocation2] sm:$0xff] 0.0
          %327 = vst [vmem:[#allocation2 + $0x8] sm:$0xff] 0.0
        $region56: #{chameleon_mlp.1} parent=35 // pred_fallthru
          _
        %v328 = vld [vmem:[#allocation3] sm:$0xff]
        %v329 = vld [vmem:[#allocation3 + $0x8] sm:$0xff]
        %v330 = vld [vmem:[%s271] sm:$0xff]
        %v331 = vld [vmem:[%s271 + $0x8] sm:$0xff]
        %v332 = vld [vmem:[%s271 + $0x10] sm:$0xff]
        %v333 = vld [vmem:[%s271 + $0x18] sm:$0xff]
        %v334 = vld [vmem:[%s271 + $0x20] sm:$0xff]
        %v335 = vld [vmem:[%s271 + $0x28] sm:$0xff]
        %v336 = vld [vmem:[%s271 + $0x30] sm:$0xff]
        %v337 = vld [vmem:[%s271 + $0x38] sm:$0xff]
        %v338 = vld [vmem:[%s271 + $0x40] sm:$0xff]
        %v339 = vld [vmem:[%s271 + $0x48] sm:$0xff]
        %v340 = vld [vmem:[%s271 + $0x50] sm:$0xff]
        %v341 = vld [vmem:[%s271 + $0x58] sm:$0xff]
        %v342 = vld [vmem:[%s271 + $0x60] sm:$0xff]
        %v343 = vld [vmem:[%s271 + $0x68] sm:$0xff]
        %v344 = vld [vmem:[%s271 + $0x70] sm:$0xff]
        %v345 = vld [vmem:[%s271 + $0x78] sm:$0xff]
        %346 = vmatprep.subr.mxu0 0.0
        %347 = vmatpush1.msra.mxu0 %v330
        %348 = vmatprep.subr.mxu0 0.0
        %349 = vmatpush1.msra.mxu0 %v331
        %350 = vmatprep.subr.mxu0 0.0
        %351 = vmatpush1.msra.mxu0 %v332
        %352 = vmatprep.subr.mxu0 0.0
        %353 = vmatpush1.msra.mxu0 %v333
        %354 = vmatprep.subr.mxu0 0.0
        %355 = vmatpush1.msra.mxu0 %v334
        %356 = vmatprep.subr.mxu0 0.0
        %357 = vmatpush1.msra.mxu0 %v335
        %358 = vmatprep.subr.mxu0 0.0
        %359 = vmatpush1.msra.mxu0 %v336
        %360 = vmatprep.subr.mxu0 0.0
        %361 = vmatpush1.msra.mxu0 %v337
        %362 = vmatprep.subr.mxu0 0.0
        %363 = vmatpush1.msra.mxu0 %v338
        %364 = vmatprep.subr.mxu0 0.0
        %365 = vmatpush1.msra.mxu0 %v339
        %366 = vmatprep.subr.mxu0 0.0
        %367 = vmatpush1.msra.mxu0 %v340
        %368 = vmatprep.subr.mxu0 0.0
        %369 = vmatpush1.msra.mxu0 %v341
        %370 = vmatprep.subr.mxu0 0.0
        %371 = vmatpush1.msra.mxu0 %v342
        %372 = vmatprep.subr.mxu0 0.0
        %373 = vmatpush1.msra.mxu0 %v343
        %374 = vmatprep.subr.mxu0 0.0
        %375 = vmatpush1.msra.mxu0 %v344
        %376 = vmatprep.subr.mxu0 0.0
        %377 = vmatpush1.msra.mxu0 %v345
        %378 = vmatprep.subr.mxu0 0.0
        %379 = vmatpush1.msra.mxu0 0.0
        %380 = vmatprep.subr.mxu0 0.0
        %381 = vmatpush1.msra.mxu0 0.0
        %382 = vmatprep.subr.mxu0 0.0
        %383 = vmatpush1.msra.mxu0 0.0
        %384 = vmatprep.subr.mxu0 0.0
        %385 = vmatpush1.msra.mxu0 0.0
        %386 = vmatprep.subr.mxu0 0.0
        %387 = vmatpush1.msra.mxu0 0.0
        %388 = vmatprep.subr.mxu0 0.0
        %389 = vmatpush1.msra.mxu0 0.0
        %390 = vmatprep.subr.mxu0 0.0
        %391 = vmatpush1.msra.mxu0 0.0
        %392 = vmatprep.subr.mxu0 0.0
        %393 = vmatpush1.msra.mxu0 0.0
        %394 = vmatprep.subr.mxu0 0.0
        %395 = vmatpush1.msra.mxu0 0.0
        %396 = vmatprep.subr.mxu0 0.0
        %397 = vmatpush1.msra.mxu0 0.0
        %398 = vmatprep.subr.mxu0 0.0
        %399 = vmatpush1.msra.mxu0 0.0
        %400 = vmatprep.subr.mxu0 0.0
        %401 = vmatpush1.msra.mxu0 0.0
        %402 = vmatprep.subr.mxu0 0.0
        %403 = vmatpush1.msra.mxu0 0.0
        %404 = vmatprep.subr.mxu0 0.0
        %405 = vmatpush1.msra.mxu0 0.0
        %406 = vmatprep.subr.mxu0 0.0
        %407 = vmatpush1.msra.mxu0 0.0
        %408 = vmatprep.subr.mxu0 0.0
        %409 = vmatpush1.msra.mxu0 0.0
        %410 = vmatprep.mubr.f32.mxu0 0.0
        %411 = vmatmul.mubr.f32.gmra.mrb[0].mxu0 %v328
        %v412 = vpop.f32.mrb[0].mxu0
        %v413 = vadd.f32 0.0, %v412
        %v414 = vpop.f32.mrb[0].mxu0
        %415 = vmatprep.mubr.f32.mxu0 0.0
        %416 = vmatmul.mubr.f32.gmra.mrb[0].mxu0 %v329
        %v417 = vpop.f32.mrb[0].mxu0
        %v418 = vadd.f32 0.0, %v417
        %v419 = vpop.f32.mrb[0].mxu0
        %420 = vdwg.mxu0
        %v421 = vld [vmem:[%s280] sm:$0xff]
        %v422 = vld [vmem:[%s280 + $0x8] sm:$0xff]
        %v423 = vld [vmem:[%s280 + $0x10] sm:$0xff]
        %v424 = vld [vmem:[%s280 + $0x18] sm:$0xff]
        %v425 = vld [vmem:[%s280 + $0x20] sm:$0xff]
        %v426 = vld [vmem:[%s280 + $0x28] sm:$0xff]
        %v427 = vld [vmem:[%s280 + $0x30] sm:$0xff]
        %v428 = vld [vmem:[%s280 + $0x38] sm:$0xff]
        %v429 = vld [vmem:[%s280 + $0x40] sm:$0xff]
        %v430 = vld [vmem:[%s280 + $0x48] sm:$0xff]
        %v431 = vld [vmem:[%s280 + $0x50] sm:$0xff]
        %v432 = vld [vmem:[%s280 + $0x58] sm:$0xff]
        %v433 = vld [vmem:[%s280 + $0x60] sm:$0xff]
        %v434 = vld [vmem:[%s280 + $0x68] sm:$0xff]
        %v435 = vld [vmem:[%s280 + $0x70] sm:$0xff]
        %v436 = vld [vmem:[%s280 + $0x78] sm:$0xff]
        %437 = vmatprep.subr.mxu0 0.0
        %438 = vmatpush1.msra.mxu0 %v421
        %439 = vmatprep.subr.mxu0 0.0
        %440 = vmatpush1.msra.mxu0 %v422
        %441 = vmatprep.subr.mxu0 0.0
        %442 = vmatpush1.msra.mxu0 %v423
        %443 = vmatprep.subr.mxu0 0.0
        %444 = vmatpush1.msra.mxu0 %v424
        %445 = vmatprep.subr.mxu0 0.0
        %446 = vmatpush1.msra.mxu0 %v425
        %447 = vmatprep.subr.mxu0 0.0
        %448 = vmatpush1.msra.mxu0 %v426
        %449 = vmatprep.subr.mxu0 0.0
        %450 = vmatpush1.msra.mxu0 %v427
        %451 = vmatprep.subr.mxu0 0.0
        %452 = vmatpush1.msra.mxu0 %v428
        %453 = vmatprep.subr.mxu0 0.0
        %454 = vmatpush1.msra.mxu0 %v429
        %455 = vmatprep.subr.mxu0 0.0
        %456 = vmatpush1.msra.mxu0 %v430
        %457 = vmatprep.subr.mxu0 0.0
        %458 = vmatpush1.msra.mxu0 %v431
        %459 = vmatprep.subr.mxu0 0.0
        %460 = vmatpush1.msra.mxu0 %v432
        %461 = vmatprep.subr.mxu0 0.0
        %462 = vmatpush1.msra.mxu0 %v433
        %463 = vmatprep.subr.mxu0 0.0
        %464 = vmatpush1.msra.mxu0 %v434
        %465 = vmatprep.subr.mxu0 0.0
        %466 = vmatpush1.msra.mxu0 %v435
        %467 = vmatprep.subr.mxu0 0.0
        %468 = vmatpush1.msra.mxu0 %v436
        %469 = vmatprep.subr.mxu0 0.0
        %470 = vmatpush1.msra.mxu0 0.0
        %471 = vmatprep.subr.mxu0 0.0
        %472 = vmatpush1.msra.mxu0 0.0
        %473 = vmatprep.subr.mxu0 0.0
        %474 = vmatpush1.msra.mxu0 0.0
        %475 = vmatprep.subr.mxu0 0.0
        %476 = vmatpush1.msra.mxu0 0.0
        %477 = vmatprep.subr.mxu0 0.0
        %478 = vmatpush1.msra.mxu0 0.0
        %479 = vmatprep.subr.mxu0 0.0
        %480 = vmatpush1.msra.mxu0 0.0
        %481 = vmatprep.subr.mxu0 0.0
        %482 = vmatpush1.msra.mxu0 0.0
        %483 = vmatprep.subr.mxu0 0.0
        %484 = vmatpush1.msra.mxu0 0.0
        %485 = vmatprep.subr.mxu0 0.0
        %486 = vmatpush1.msra.mxu0 0.0
        %487 = vmatprep.subr.mxu0 0.0
        %488 = vmatpush1.msra.mxu0 0.0
        %489 = vmatprep.subr.mxu0 0.0
        %490 = vmatpush1.msra.mxu0 0.0
        %491 = vmatprep.subr.mxu0 0.0
        %492 = vmatpush1.msra.mxu0 0.0
        %493 = vmatprep.subr.mxu0 0.0
        %494 = vmatpush1.msra.mxu0 0.0
        %495 = vmatprep.subr.mxu0 0.0
        %496 = vmatpush1.msra.mxu0 0.0
        %497 = vmatprep.subr.mxu0 0.0
        %498 = vmatpush1.msra.mxu0 0.0
        %499 = vmatprep.subr.mxu0 0.0
        %500 = vmatpush1.msra.mxu0 0.0
        %501 = vmatprep.mubr.f32.mxu0 0.0
        %502 = vmatmul.mubr.f32.gmra.mrb[0].mxu0 %v328
        %v503 = vpop.f32.mrb[0].mxu0
        %v504 = vadd.f32 0.0, %v503
        %v505 = vpop.f32.mrb[0].mxu0
        %506 = vmatprep.mubr.f32.mxu0 0.0
        %507 = vmatmul.mubr.f32.gmra.mrb[0].mxu0 %v329
        %v508 = vpop.f32.mrb[0].mxu0
        %v509 = vadd.f32 0.0, %v508
        %v510 = vpop.f32.mrb[0].mxu0
        %511 = vdwg.mxu0
        %v512 = vxor.u32 %v413, 2147483648
        %v513 = vxor.u32 %v418, 2147483648
        %v514 = vmul.f32 %v512, 1.442695
        %v515 = vpow.pop %v514
        %v516 = vmul.f32 %v513, 1.442695
        %v517 = vpow.pop %v516
        %v518 = vadd.f32 %v515, 1.0
        %v519 = vadd.f32 %v517, 1.0
        %v520 = vrcp.pop %v518
        %v521 = vmul.f32 1.0, %v520
        %v522 = vrcp.pop %v519
        %v523 = vmul.f32 1.0, %v522
        %v524 = vmul.f32 %v413, %v521
        %v525 = vmul.f32 %v418, %v523
        %v526 = vmul.f32 %v524, %v504
        %v527 = vmul.f32 %v525, %v509
        %v528 = vld [vmem:[#allocation2] sm:$0xff]
        %v529 = vld [vmem:[#allocation2 + $0x8] sm:$0xff]
        %v530 = vld [vmem:[%s289] sm:$0xff]
        %v531 = vld [vmem:[%s289 + $0x8] sm:$0xff]
        %v532 = vld [vmem:[%s289 + $0x10] sm:$0xff]
        %v533 = vld [vmem:[%s289 + $0x18] sm:$0xff]
        %v534 = vld [vmem:[%s289 + $0x20] sm:$0xff]
        %v535 = vld [vmem:[%s289 + $0x28] sm:$0xff]
        %v536 = vld [vmem:[%s289 + $0x30] sm:$0xff]
        %v537 = vld [vmem:[%s289 + $0x38] sm:$0xff]
        %v538 = vld [vmem:[%s289 + $0x40] sm:$0xff]
        %v539 = vld [vmem:[%s289 + $0x48] sm:$0xff]
        %v540 = vld [vmem:[%s289 + $0x50] sm:$0xff]
        %v541 = vld [vmem:[%s289 + $0x58] sm:$0xff]
        %v542 = vld [vmem:[%s289 + $0x60] sm:$0xff]
        %v543 = vld [vmem:[%s289 + $0x68] sm:$0xff]
        %v544 = vld [vmem:[%s289 + $0x70] sm:$0xff]
        %v545 = vld [vmem:[%s289 + $0x78] sm:$0xff]
        %546 = vmatprep.subr.mxu0 0.0
        %547 = vmatpush1.msra.mxu0 %v530
        %548 = vmatprep.subr.mxu0 0.0
        %549 = vmatpush1.msra.mxu0 %v531
        %550 = vmatprep.subr.mxu0 0.0
        %551 = vmatpush1.msra.mxu0 %v532
        %552 = vmatprep.subr.mxu0 0.0
        %553 = vmatpush1.msra.mxu0 %v533
        %554 = vmatprep.subr.mxu0 0.0
        %555 = vmatpush1.msra.mxu0 %v534
        %556 = vmatprep.subr.mxu0 0.0
        %557 = vmatpush1.msra.mxu0 %v535
        %558 = vmatprep.subr.mxu0 0.0
        %559 = vmatpush1.msra.mxu0 %v536
        %560 = vmatprep.subr.mxu0 0.0
        %561 = vmatpush1.msra.mxu0 %v537
        %562 = vmatprep.subr.mxu0 0.0
        %563 = vmatpush1.msra.mxu0 %v538
        %564 = vmatprep.subr.mxu0 0.0
        %565 = vmatpush1.msra.mxu0 %v539
        %566 = vmatprep.subr.mxu0 0.0
        %567 = vmatpush1.msra.mxu0 %v540
        %568 = vmatprep.subr.mxu0 0.0
        %569 = vmatpush1.msra.mxu0 %v541
        %570 = vmatprep.subr.mxu0 0.0
        %571 = vmatpush1.msra.mxu0 %v542
        %572 = vmatprep.subr.mxu0 0.0
        %573 = vmatpush1.msra.mxu0 %v543
        %574 = vmatprep.subr.mxu0 0.0
        %575 = vmatpush1.msra.mxu0 %v544
        %576 = vmatprep.subr.mxu0 0.0
        %577 = vmatpush1.msra.mxu0 %v545
        %578 = vmatprep.subr.mxu0 0.0
        %579 = vmatpush1.msra.mxu0 0.0
        %580 = vmatprep.subr.mxu0 0.0
        %581 = vmatpush1.msra.mxu0 0.0
        %582 = vmatprep.subr.mxu0 0.0
        %583 = vmatpush1.msra.mxu0 0.0
        %584 = vmatprep.subr.mxu0 0.0
        %585 = vmatpush1.msra.mxu0 0.0
        %586 = vmatprep.subr.mxu0 0.0
        %587 = vmatpush1.msra.mxu0 0.0
        %588 = vmatprep.subr.mxu0 0.0
        %589 = vmatpush1.msra.mxu0 0.0
        %590 = vmatprep.subr.mxu0 0.0
        %591 = vmatpush1.msra.mxu0 0.0
        %592 = vmatprep.subr.mxu0 0.0
        %593 = vmatpush1.msra.mxu0 0.0
        %594 = vmatprep.subr.mxu0 0.0
        %595 = vmatpush1.msra.mxu0 0.0
        %596 = vmatprep.subr.mxu0 0.0
        %597 = vmatpush1.msra.mxu0 0.0
        %598 = vmatprep.subr.mxu0 0.0
        %599 = vmatpush1.msra.mxu0 0.0
        %600 = vmatprep.subr.mxu0 0.0
        %601 = vmatpush1.msra.mxu0 0.0
        %602 = vmatprep.subr.mxu0 0.0
        %603 = vmatpush1.msra.mxu0 0.0
        %604 = vmatprep.subr.mxu0 0.0
        %605 = vmatpush1.msra.mxu0 0.0
        %606 = vmatprep.subr.mxu0 0.0
        %607 = vmatpush1.msra.mxu0 0.0
        %608 = vmatprep.subr.mxu0 0.0
        %609 = vmatpush1.msra.mxu0 0.0
        %610 = vmatprep.mubr.f32.mxu0 0.0
        %611 = vmatmul.mubr.f32.gmra.mrb[0].mxu0 %v526
        %v612 = vpop.f32.mrb[0].mxu0
        %v613 = vadd.f32 0.0, %v612
        %v614 = vpop.f32.mrb[0].mxu0
        %615 = vmatprep.mubr.f32.mxu0 0.0
        %616 = vmatmul.mubr.f32.gmra.mrb[0].mxu0 %v527
        %v617 = vpop.f32.mrb[0].mxu0
        %v618 = vadd.f32 0.0, %v617
        %v619 = vpop.f32.mrb[0].mxu0
        %620 = vdwg.mxu0
        %v621 = vadd.f32 %v528, %v613
        %v622 = vadd.f32 %v529, %v618
        %623 = vst [vmem:[#allocation2] sm:$0xff] %v621
        %624 = vst [vmem:[#allocation2 + $0x8] sm:$0xff] %v622
        %p625 = scmp.eq.s32.totalorder %s28, 1
        // Predicated region
        $region57: #{chameleon_mlp.1} parent=35 // pred_check
          %p626 = pneg %p625
        $region58: #{chameleon_mlp.1} parent=35 // pred_check_branch
          %628 = sbr.rel (%p626) target = $region60
        $region59: #{chameleon_mlp.1} parent=35 // pred_region
          %v629 = vld [vmem:[#allocation2] sm:$0xff]
          %v630 = vld [vmem:[#allocation2 + $0x8] sm:$0xff]
          %631 = vst [vmem:[#allocation11] sm:$0xff] %v629
          %632 = vst [vmem:[#allocation11 + $0x8] sm:$0xff] %v630
        $region60: #{chameleon_mlp.1} parent=35 // pred_fallthru
          _
        // Predicated region
        $region61: #{chameleon_mlp.1} parent=35 // pred_check
          %p633 = pneg %p157
        $region62: #{chameleon_mlp.1} parent=35 // pred_check_branch
          %635 = sbr.rel (%p633) target = $region64
        $region63: #{chameleon_mlp.1} parent=35 // pred_region
          %s636 = smul.u32 2, %s27
          %s638 = ssub.s32 256, 256
          %639 = vsyncadd [#allocation5], %s638
          %s640 = smul.addr %s636, 128
          %s641 = scalar_lea.hbm %s4, %s640
          %s642 = sshll.u32 [#allocation11], 4
          %s643 = int_to_ptr.vmem [resolvable:$true] %s642
          %648 = dma.vmem_to_hbm [thread:$0]  %s643, 256, %s641, [#allocation5], 128, 128, 8
        $region64: #{chameleon_mlp.1} parent=35 // pred_fallthru
          _
        // Predicated region
        $region65: #{chameleon_mlp.1} parent=35 // pred_check
          %p649 = pneg %p157
        $region66: #{chameleon_mlp.1} parent=35 // pred_check_branch
          %651 = sbr.rel (%p649) target = $region68
        $region67: #{chameleon_mlp.1} parent=35 // pred_region
          %652 = dma.done [#allocation5], 256
        $region68: #{chameleon_mlp.1} parent=35 // pred_fallthru
          _
      $region36: #{chameleon_mlp.1} parent=5 // pred_fallthru
        _
      %p653 = scmp.le.s32.totalorder 2, %s18
      // Predicated region
      $region69: #{chameleon_mlp.1} parent=5 // pred_check
        %p654 = pneg %p653
      $region70: #{chameleon_mlp.1} parent=5 // pred_check_branch
        %656 = sbr.rel (%p654) target = $region72
      $region71: #{chameleon_mlp.1} parent=5 // pred_region
        %s657 = ssub.s32 %s18, 2
      $region72: #{chameleon_mlp.1} parent=5 // pred_fallthru
        _
    $region6: #{chameleon_mlp.1} parent=1 // loop_footer
      %s22 = sadd.s32 1, %s18
    $region7: #{chameleon_mlp.1} parent=1 // loop_footer_branch
      %17 = sbr.rel target = $region3
    $region8: #{chameleon_mlp.1} parent=1 // loop_exit
      _
    %658 = vsyncpa [#allocation4], 1
    %s659 = scalar_lea.sflag [#allocation4], 1
    %660 = vsyncpa %s659, 1
    %661 = vsyncpa [#allocation7], 1
    %s662 = scalar_lea.sflag [#allocation7], 1
    %663 = vsyncpa %s662, 1
    %664 = vsyncpa [#allocation10], 1
    %s665 = scalar_lea.sflag [#allocation10], 1
    %666 = vsyncpa %s665, 1
    %667 = vsyncpa [#allocation5], 1
    %s668 = scalar_lea.sflag [#allocation5], 1
    %669 = vsyncpa %s668, 1

</llo_original>
